<compile_context>
chip_gen: v6e
topology: v6e:2x2x1
jax: 0.10.0
libtpu: 0.0.40
codegen_flags: <defaults>
</compile_context>

<pallas_src>
import functools
import numpy as np

import jax
import jax.numpy as jnp
from jax.experimental import pallas as pl
from jax.experimental.pallas import tpu as pltpu


def _round_up(x, m):
    return ((x + m - 1) // m) * m


def _sigmoid(z):
    # Numerically stable sigmoid on the f32 elementwise path: exp argument is
    # always <= 0 (no inf intermediates); exp + divide land on the EUP slot.
    ez = jnp.exp(-jnp.abs(z))
    r = 1.0 / (1.0 + ez)
    return jnp.where(z >= 0, r, ez * r)


# ----------------------------------------------------------------------------
# Kernel: one grid step == t_blk recurrence steps for one batch tile.
# ----------------------------------------------------------------------------

def _recurrence_kernel(gx_ref, a_ref, h0_ref, wh_ref, bhn_ref, out_ref, h_scr,
                       *, t_blk, hp, n_gates, is_augru):
    """gx_ref : (t_blk, b_blk, n_gates*hp)  precomputed x-side gate pre-activations
       a_ref  : (t_blk, b_blk, 1)           attention scores
       h0_ref : (b_blk, hp) f32             initial hidden state
       wh_ref : (hp, n_gates*hp)            fused hidden-side gate weights (resident)
       bhn_ref: (1, hp) f32                 hidden-side candidate bias (inside reset*(...))
       out_ref: (t_blk, b_blk, hp)          hidden states (lane-dense)
       h_scr  : (b_blk, hp) f32             hidden carry across time blocks

    NOTE: the f32 carry in h_scr is only correct because the time axis is the
    innermost, sequential ("arbitrary") grid dimension and is re-initialised at
    t == 0 per batch tile. Do NOT reorder the grid or mark time "parallel".
    """
    @pl.when(pl.program_id(1) == 0)
    def _():
        h_scr[...] = h0_ref[...]

    h = h_scr[...]                       # (b_blk, hp) f32 carry, kept in registers
    wh = wh_ref[...]                     # VMEM-resident fused gate weights
    bhn = bhn_ref[...]                   # (1, hp)

    for s in range(t_blk):               # short time tile, fully unrolled
        gx = gx_ref[s].astype(jnp.float32)            # (b_blk, n_gates*hp)
        a = a_ref[s].astype(jnp.float32)              # (b_blk, 1)

        # single fused hidden-side matmul per step, f32 accumulation on the MXU
        gh = jnp.dot(h.astype(wh.dtype), wh, preferred_element_type=jnp.float32)

        reset = _sigmoid(gx[:, :hp] + gh[:, :hp])
        x_n = gx[:, (n_gates - 1) * hp:]
        h_n = gh[:, (n_gates - 1) * hp:]
        new_state = jnp.tanh(x_n + reset * (h_n + bhn))

        if is_augru:
            update = a * _sigmoid(gx[:, hp:2 * hp] + gh[:, hp:2 * hp])
        else:                             # AGRU: attention replaces the update gate
            update = a
        h = (1.0 - update) * h + update * new_state
        out_ref[s] = h.astype(out_ref.dtype)

    h_scr[...] = h


# ----------------------------------------------------------------------------
# Wrapper
# ----------------------------------------------------------------------------

def _tpu_limits():
    """(physical VMEM bytes, scoped-VMEM default, has-2-TensorCores) — best effort."""
    vmem_cap = 128 << 20
    try:
        vmem_cap = int(pltpu.get_tpu_info().vmem_capacity_bytes)
    except Exception:
        pass
    kind = ""
    try:
        kind = jax.devices()[0].device_kind.lower()
    except Exception:
        pass
    scoped_default = (16 << 20) if ("v5 lite" in kind or "v5e" in kind) else (32 << 20)
    two_cores = vmem_cap <= (96 << 20)   # v7x-class: 64 MiB VMEM/TC, 2 TCs per chip
    return vmem_cap, scoped_default, two_cores


def dynamic_gru(x_data, att_data, batch_sizes, params, hx=None, gru_type="AGRU",
                matmul_dtype=None):
    """Pallas DynamicGRU.forward on a packed sequence.

    x_data:       (total_steps, input_size) packed data (PackedSequence.data)
    att_data:     (total_steps,) or (total_steps, 1) packed attention scores
    batch_sizes:  static non-increasing ints (PackedSequence.batch_sizes)
    params:       weight_ih (3H, I), weight_hh (3H, H), optional bias_ih/bias_hh (3H,)
    hx:           optional initial hidden state (batch_sizes[0], H); kept in f32
    matmul_dtype: MXU operand dtype (default: x dtype). Pass jnp.bfloat16 for
                  higher matmul throughput; accumulation and the carry stay f32.
    Returns the packed output data (total_steps, H).
    """
    if gru_type not in ("AGRU", "AUGRU"):
        raise ValueError(f"unsupported gru_type: {gru_type}")

    batch_sizes = np.asarray(batch_sizes, dtype=np.int64)
    if batch_sizes.ndim != 1 or batch_sizes.size == 0:
        raise ValueError("batch_sizes must be a non-empty 1-D sequence")
    if np.any(batch_sizes[:-1] < batch_sizes[1:]):
        raise ValueError("batch_sizes must be non-increasing (packed sequence)")

    T = int(batch_sizes.size)
    B = int(batch_sizes[0])
    total = int(batch_sizes.sum())

    x_data = jnp.asarray(x_data)
    assert x_data.shape[0] == total
    I = int(x_data.shape[-1])
    dtype = x_data.dtype
    dsz = np.dtype(dtype).itemsize

    W_ih = jnp.asarray(params["weight_ih"])      # (3H, I)
    W_hh = jnp.asarray(params["weight_hh"])      # (3H, H)
    H = int(W_hh.shape[-1])
    b_ih = params.get("bias_ih", None)
    b_hh = params.get("bias_hh", None)
    b_ih = jnp.zeros((3 * H,), W_ih.dtype) if b_ih is None else jnp.asarray(b_ih)
    b_hh = jnp.zeros((3 * H,), W_hh.dtype) if b_hh is None else jnp.asarray(b_hh)

    is_augru = gru_type == "AUGRU"
    nG = 3 if is_augru else 2                    # gate order: [reset, (update,) candidate]
    Hp = _round_up(H, 128)                       # lane-pad per-gate H -> dense stores,
                                                 # aligned fused-gate slices, full MXU N
    mm_dtype = dtype if matmul_dtype is None else matmul_dtype
    mm_is_f32 = np.dtype(mm_dtype) == np.dtype(np.float32)
    gx_dtype = jnp.float32 if mm_is_f32 else jnp.bfloat16
    gx_dsz = np.dtype(gx_dtype).itemsize
    prec = jax.lax.Precision.HIGHEST if mm_is_f32 else jax.lax.Precision.DEFAULT

    # ---- generation-aware tiling (v7x: 64 MiB VMEM + 2 TCs; v5e/v6e: 128 MiB, 1 TC)
    vmem_cap, scoped_default, two_cores = _tpu_limits()
    t_blk = int(min(8, T))                       # recurrence steps per grid step
    T_pad = _round_up(T, t_blk)

    per_row = (2 * t_blk * (nG * Hp * gx_dsz + dsz + Hp * dsz)   # gx/att/out streams, x2 buffers
               + 2 * Hp * 4                                      # h0 tile (f32), x2 buffers
               + 12 * Hp * 4)                                    # f32 carry + elementwise temps
    if two_cores:
        budget, b_cap = 24 << 20, 256            # v7x: leave headroom under 64 MiB
    else:
        budget, b_cap = 48 << 20, 1024           # v5e/v6e: bigger single tiles
    B_pad0 = _round_up(B, 8)
    b_blk = min(B_pad0, b_cap, max(8, (budget // per_row) // 8 * 8))
    if b_blk >= 256:
        b_blk = (b_blk // 128) * 128             # keep MXU M a multiple of 128
    b_blk = max(8, b_blk)
    # split across v7x's two TensorCores only when both halves stay >= 128 rows
    if two_cores and _round_up(B, b_blk) == b_blk and b_blk >= 256:
        b_blk = _round_up(b_blk // 2, 128)
    B_pad = _round_up(B, b_blk)
    nb = B_pad // b_blk

    # ---- packed -> padded time-major (T_pad, B_pad, *); padded rows are zero,
    #      never gathered back, and (non-increasing batch_sizes) never observed.
    offsets = np.concatenate([[0], np.cumsum(batch_sizes)]).astype(np.int64)
    idx = np.zeros((T, B_pad), np.int32)
    valid = np.zeros((T, B_pad), np.bool_)
    for t in range(T):
        b = int(batch_sizes[t])
        beg = int(offsets[t])
        idx[t, :b] = np.arange(beg, beg + b, dtype=np.int32)
        valid[t, :b] = True
    idx_j = jnp.asarray(idx)
    valid_j = jnp.asarray(valid)

    att_flat = jnp.asarray(att_data).reshape(-1).astype(dtype)
    zero = jnp.zeros((), dtype)
    x_pad = jnp.where(valid_j[:, :, None], x_data[idx_j], zero)                  # (T, B_pad, I)
    a_pad = jnp.where(valid_j[:, :, None], att_flat[idx_j][:, :, None], zero)    # (T, B_pad, 1)
    if T_pad > T:
        x_pad = jnp.pad(x_pad, ((0, T_pad - T), (0, 0), (0, 0)))
        a_pad = jnp.pad(a_pad, ((0, T_pad - T), (0, 0), (0, 0)))

    # ---- per-gate weights: pre-transposed, lane-padded to Hp, fused along the gate axis.
    def pad_cols(m):                             # (d, H) -> (d, Hp)
        return jnp.pad(m, ((0, 0), (0, Hp - H)))

    def pad_bias(v):                             # (H,) -> (1, Hp)
        return jnp.pad(v.reshape(1, H), ((0, 0), (0, Hp - H)))

    wi_r, wi_z, wi_n = W_ih[:H].T, W_ih[H:2 * H].T, W_ih[2 * H:].T       # (I, H)
    wh_r, wh_z, wh_n = W_hh[:H].T, W_hh[H:2 * H].T, W_hh[2 * H:].T       # (H, H)
    if is_augru:
        wi_list, wh_list = [wi_r, wi_z, wi_n], [wh_r, wh_z, wh_n]
        bx_list = [b_ih[:H] + b_hh[:H], b_ih[H:2 * H] + b_hh[H:2 * H], b_ih[2 * H:]]
    else:
        wi_list, wh_list = [wi_r, wi_n], [wh_r, wh_n]
        bx_list = [b_ih[:H] + b_hh[:H], b_ih[2 * H:]]

    wi_cat = jnp.concatenate([pad_cols(w) for w in wi_list], axis=1)     # (I, nG*Hp)
    wh_cat = jnp.concatenate(
        [jnp.pad(w, ((0, Hp - H), (0, Hp - H))) for w in wh_list], axis=1
    ).astype(mm_dtype)                                                    # (Hp, nG*Hp)
    bx_cat = jnp.concatenate([pad_bias(b) for b in bx_list], axis=1).astype(jnp.float32)
    bh_n = pad_bias(b_hh[2 * H:]).astype(jnp.float32)     # stays inside reset*(h_n + bh_n)

    # ---- hoisted input projection: ONE big matmul over all steps (outside the
    #      serial recurrence, near MXU roofline); x-side biases folded in.
    gx = jnp.dot(x_pad.reshape(T_pad * B_pad, I).astype(mm_dtype),
                 wi_cat.astype(mm_dtype),
                 preferred_element_type=jnp.float32, precision=prec) + bx_cat
    gx = gx.reshape(T_pad, B_pad, nG * Hp).astype(gx_dtype)

    if hx is None:
        h0 = jnp.zeros((B_pad, Hp), jnp.float32)
    else:
        h0 = jnp.zeros((B_pad, Hp), jnp.float32).at[:B, :H].set(
            jnp.asarray(hx).astype(jnp.float32))

    kernel = functools.partial(_recurrence_kernel, t_blk=t_blk, hp=Hp,
                               n_gates=nG, is_augru=is_augru)

    gx_spec = pl.BlockSpec((t_blk, b_blk, nG * Hp), lambda bb, tb: (tb, bb, 0))
    a_spec = pl.BlockSpec((t_blk, b_blk, 1), lambda bb, tb: (tb, bb, 0))
    h0_spec = pl.BlockSpec((b_blk, Hp), lambda bb, tb: (bb, 0))
    wh_spec = pl.BlockSpec((Hp, nG * Hp), lambda bb, tb: (0, 0))          # resident weights
    bhn_spec = pl.BlockSpec((1, Hp), lambda bb, tb: (0, 0))
    out_spec = pl.BlockSpec((t_blk, b_blk, Hp), lambda bb, tb: (tb, bb, 0))

    # ---- VMEM budget (double-buffered streams + resident weights + temporaries)
    wh_bytes = int(np.dtype(mm_dtype).itemsize) * Hp * nG * Hp
    vmem_est = (2 * wh_bytes + 2 * 4 * Hp
                + 2 * 4 * b_blk * Hp                                      # h0 (f32)
                + 2 * t_blk * b_blk * (nG * Hp * gx_dsz + dsz + Hp * dsz)
                + 12 * 4 * b_blk * Hp)                                    # carry + temps
    cp_kwargs = dict(dimension_semantics=("parallel", "arbitrary"))       # time stays "arbitrary"
    if vmem_est > scoped_default - (2 << 20):
        cp_kwargs["vmem_limit_bytes"] = int(
            min(max(vmem_est + (8 << 20), scoped_default),
                max(vmem_cap - (8 << 20), scoped_default)))
    compiler_params = pltpu.CompilerParams(**cp_kwargs)

    cost = pl.CostEstimate(
        flops=int(2 * T_pad * B_pad * Hp * nG * Hp + 14 * T_pad * B_pad * Hp),
        transcendentals=int(T_pad * B_pad * Hp * nG),
        bytes_accessed=int(T_pad * B_pad * (nG * Hp * gx_dsz + dsz + Hp * dsz)
                           + wh_bytes + 4 * B_pad * Hp),
    )

    out_pad = pl.pallas_call(
        kernel,
        out_shape=jax.ShapeDtypeStruct((T_pad, B_pad, Hp), dtype),
        grid_spec=pltpu.PrefetchScalarGridSpec(
            num_scalar_prefetch=0,
            grid=(nb, T_pad // t_blk),
            in_specs=[gx_spec, a_spec, h0_spec, wh_spec, bhn_spec],
            out_specs=out_spec,
            scratch_shapes=[pltpu.VMEM((b_blk, Hp), jnp.float32)],
        ),
        compiler_params=compiler_params,
        cost_estimate=cost,
    )(gx, a_pad, h0, wh_cat, bh_n)

    # ---- padded -> packed (row-major flatnonzero over the first T rows == packed order)
    gather_back = jnp.asarray(np.flatnonzero(valid.reshape(-1)).astype(np.int32))
    return out_pad.reshape(T_pad * B_pad, Hp)[gather_back][:, :H]


# ----------------------------------------------------------------------------
# Pure-JAX reference (mirrors the PyTorch packed-loop forward exactly)
# ----------------------------------------------------------------------------

def _dynamic_gru_ref(x_data, att_data, batch_sizes, params, hx=None, gru_type="AGRU"):
    W_ih = jnp.asarray(params["weight_ih"])
    W_hh = jnp.asarray(params["weight_hh"])
    H = W_hh.shape[-1]
    b_ih = params.get("bias_ih", None)
    b_hh = params.get("bias_hh", None)
    b_ih = jnp.zeros((3 * H,), W_ih.dtype) if b_ih is None else jnp.asarray(b_ih)
    b_hh = jnp.zeros((3 * H,), W_hh.dtype) if b_hh is None else jnp.asarray(b_hh)
    att = jnp.asarray(att_data).reshape(-1)

    B0 = int(batch_sizes[0])
    h = jnp.zeros((B0, H), x_data.dtype) if hx is None else jnp.asarray(hx)
    hi = jax.lax.Precision.HIGHEST
    outs = []
    begin = 0
    for b in batch_sizes:
        b = int(b)
        x_t = x_data[begin:begin + b]
        a_t = att[begin:begin + b].reshape(-1, 1)
        h_t = h[:b]
        gi = jnp.dot(x_t, W_ih.T, precision=hi) + b_ih
        gh = jnp.dot(h_t, W_hh.T, precision=hi) + b_hh
        i_r, i_z, i_n = gi[:, :H], gi[:, H:2 * H], gi[:, 2 * H:]
        h_r, h_z, h_n = gh[:, :H], gh[:, H:2 * H], gh[:, 2 * H:]
        r = jax.nn.sigmoid(i_r + h_r)
        n = jnp.tanh(i_n + r * h_n)
        if gru_type == "AGRU":
            hy = (1.0 - a_t) * h_t + a_t * n
        else:
            z = a_t * jax.nn.sigmoid(i_z + h_z)
            hy = (1.0 - z) * h_t + z * n
        outs.append(hy)
        h = hy
        begin += b
    return jnp.concatenate(outs, axis=0)


if __name__ == "__main__":
    input_size, hidden_size = 16, 32

    key = jax.random.PRNGKey(0)
    k1, k2, k3, k4, kx, ka, kh = jax.random.split(key, 7)
    params = {
        "weight_ih": 0.1 * jax.random.normal(k1, (3 * hidden_size, input_size), jnp.float32),
        "weight_hh": 0.1 * jax.random.normal(k2, (3 * hidden_size, hidden_size), jnp.float32),
        "bias_ih": 0.05 * jax.random.normal(k3, (3 * hidden_size,), jnp.float32),
        "bias_hh": 0.05 * jax.random.normal(k4, (3 * hidden_size,), jnp.float32),
    }

    cases = [
        ([4, 4, 3, 2, 1], False),                          # T < time tile
        ([10, 10, 9, 7, 7, 5, 4, 3, 2, 2, 1, 1], True),    # T > time tile (time-blocked + padded)
    ]
    for batch_sizes, use_hx in cases:
        total = int(sum(batch_sizes))
        x_data = jax.random.normal(kx, (total, input_size), dtype=jnp.float32)
        att_data = jax.random.uniform(ka, (total,), dtype=jnp.float32)
        hx = (jax.random.normal(kh, (batch_sizes[0], hidden_size), jnp.float32)
              if use_hx else None)
        for gru_type in ("AGRU", "AUGRU"):
            out = dynamic_gru(x_data, att_data, batch_sizes, params, hx=hx, gru_type=gru_type)
            out = jax.block_until_ready(out)
            ref = _dynamic_gru_ref(x_data, att_data, batch_sizes, params, hx=hx,
                                   gru_type=gru_type)
            assert out.shape == (total, hidden_size)
            err = float(jnp.max(jnp.abs(out - ref)))
            assert err < 5e-3, f"{gru_type} bs={batch_sizes}: max abs diff = {err}"

    print("KERNEL_OK")
</pallas_src>

<mosaic_0001>
module attributes {stable_mosaic.version = 11 : i64} {
  func.func @_recurrence_kernel(%arg0: i32, %arg1: i32, %arg2: memref<5x8x256xf32, #tpu.memory_space<vmem>>, %arg3: memref<5x8x1xf32, #tpu.memory_space<vmem>>, %arg4: memref<8x128xf32, #tpu.memory_space<vmem>>, %arg5: memref<128x256xf32, #tpu.memory_space<vmem>>, %arg6: memref<1x128xf32, #tpu.memory_space<vmem>>, %arg7: memref<5x8x128xf32, #tpu.memory_space<vmem>>, %arg8: memref<8x128xf32, #tpu.memory_space<vmem>>) attributes {dimension_semantics = [#tpu.dimension_semantics<parallel>, #tpu.dimension_semantics<arbitrary>], iteration_bounds = array<i64: 1, 1>, scalar_prefetch = 0 : i64, scratch_operands = 1 : i64, tpu.core_type = #tpu.core_type<tc>, window_params = [{transform_indices = @transform_0, window_bounds = array<i64: 5, 8, 256>}, {transform_indices = @transform_1, window_bounds = array<i64: 5, 8, 1>}, {transform_indices = @transform_2, window_bounds = array<i64: 8, 128>}, {pipeline_mode = #tpu.pipeline_mode<synchronous>, transform_indices = @transform_3, window_bounds = array<i64: 128, 256>}, {pipeline_mode = #tpu.pipeline_mode<synchronous>, transform_indices = @transform_4, window_bounds = array<i64: 1, 128>}, {transform_indices = @transform_5, window_bounds = array<i64: 5, 8, 128>}]} {
    %c0_i32 = arith.constant 0 : i32
    %0 = arith.cmpi eq, %arg1, %c0_i32 : i32
    %1 = arith.extui %0 : i1 to i32
    %c0_i32_0 = arith.constant 0 : i32
    %2 = arith.cmpi ne, %1, %c0_i32_0 : i32
    scf.if %2 {
      %c0_78 = arith.constant 0 : index
      %c0_79 = arith.constant 0 : index
      %192 = vector.load %arg4[%c0_78, %c0_79] : memref<8x128xf32, #tpu.memory_space<vmem>>, vector<8x128xf32>
      %c0_80 = arith.constant 0 : index
      %c0_81 = arith.constant 0 : index
      %193 = vector.load %arg8[%c0_80, %c0_81] : memref<8x128xf32, #tpu.memory_space<vmem>>, vector<8x128xf32>
      tpu.vector_store %arg8[%c0_80, %c0_81], %192 {strides = array<i32>} : memref<8x128xf32, #tpu.memory_space<vmem>>, vector<8x128xf32>,
    } else {
    }
    %c0 = arith.constant 0 : index
    %c0_1 = arith.constant 0 : index
    %3 = vector.load %arg8[%c0, %c0_1] : memref<8x128xf32, #tpu.memory_space<vmem>>, vector<8x128xf32>
    %c0_2 = arith.constant 0 : index
    %c0_3 = arith.constant 0 : index
    %4 = vector.load %arg5[%c0_2, %c0_3] : memref<128x256xf32, #tpu.memory_space<vmem>>, vector<128x256xf32>
    %c0_4 = arith.constant 0 : index
    %c0_5 = arith.constant 0 : index
    %5 = vector.load %arg6[%c0_4, %c0_5] : memref<1x128xf32, #tpu.memory_space<vmem>>, vector<1x128xf32>
    %c0_6 = arith.constant 0 : index
    %c0_7 = arith.constant 0 : index
    %c0_8 = arith.constant 0 : index
    %6 = vector.load %arg2[%c0_6, %c0_7, %c0_8] : memref<5x8x256xf32, #tpu.memory_space<vmem>>, vector<1x8x256xf32>
    %7 = vector.shape_cast %6 : vector<1x8x256xf32> to vector<8x256xf32>
    %c0_9 = arith.constant 0 : index
    %c0_10 = arith.constant 0 : index
    %c0_11 = arith.constant 0 : index
    %8 = vector.load %arg3[%c0_9, %c0_10, %c0_11] : memref<5x8x1xf32, #tpu.memory_space<vmem>>, vector<1x8x1xf32>
    %9 = vector.shape_cast %8 : vector<1x8x1xf32> to vector<8x1xf32>
    %cst = arith.constant dense<0.000000e+00> : vector<8x256xf32>
    %10 = tpu.matmul %3, %4, %cst {dimension_numbers = #tpu.dot_dimension_numbers<[1], [0], [0], [1], [0, 0, 1, 1], [], []>} : vector<8x128xf32>, vector<128x256xf32>, vector<8x256xf32> -> vector<8x256xf32>
    %11 = vector.extract_strided_slice %7 {offsets = [0, 0], sizes = [8, 128], strides = [1, 1]} : vector<8x256xf32> to vector<8x128xf32>
    %12 = vector.extract_strided_slice %10 {offsets = [0, 0], sizes = [8, 128], strides = [1, 1]} : vector<8x256xf32> to vector<8x128xf32>
    %13 = arith.addf %11, %12 : vector<8x128xf32>
    %14 = math.absf %13 : vector<8x128xf32>
    %cst_12 = arith.constant 0.000000e+00 : f32
    %15 = vector.broadcast %cst_12 : f32 to vector<8x128xf32>
    %16 = arith.subf %15, %14 : vector<8x128xf32>
    %17 = math.exp %16 : vector<8x128xf32>
    %cst_13 = arith.constant 1.000000e+00 : f32
    %18 = vector.broadcast %cst_13 : f32 to vector<8x128xf32>
    %19 = arith.addf %18, %17 : vector<8x128xf32>
    %cst_14 = arith.constant 1.000000e+00 : f32
    %20 = vector.broadcast %cst_14 : f32 to vector<8x128xf32>
    %21 = arith.divf %20, %19 : vector<8x128xf32>
    %cst_15 = arith.constant 0.000000e+00 : f32
    %22 = vector.broadcast %cst_15 : f32 to vector<8x128xf32>
    %23 = arith.cmpf oge, %13, %22 : vector<8x128xf32>
    %24 = arith.mulf %17, %21 : vector<8x128xf32>
    %25 = arith.select %23, %21, %24 : vector<8x128xi1>, vector<8x128xf32>
    %26 = vector.extract_strided_slice %7 {offsets = [0, 128], sizes = [8, 128], strides = [1, 1]} : vector<8x256xf32> to vector<8x128xf32>
    %27 = vector.extract_strided_slice %10 {offsets = [0, 128], sizes = [8, 128], strides = [1, 1]} : vector<8x256xf32> to vector<8x128xf32>
    %28 = vector.broadcast %5 : vector<1x128xf32> to vector<8x128xf32>
    %29 = arith.addf %27, %28 : vector<8x128xf32>
    %30 = arith.mulf %25, %29 : vector<8x128xf32>
    %31 = arith.addf %26, %30 : vector<8x128xf32>
    %32 = math.tanh %31 : vector<8x128xf32>
    %cst_16 = arith.constant 1.000000e+00 : f32
    %33 = vector.broadcast %cst_16 : f32 to vector<8x1xf32>
    %34 = arith.subf %33, %9 : vector<8x1xf32>
    %35 = vector.broadcast %34 : vector<8x1xf32> to vector<8x128xf32>
    %36 = arith.mulf %35, %3 : vector<8x128xf32>
    %37 = vector.broadcast %9 : vector<8x1xf32> to vector<8x128xf32>
    %38 = arith.mulf %37, %32 : vector<8x128xf32>
    %39 = arith.addf %36, %38 : vector<8x128xf32>
    %c0_17 = arith.constant 0 : index
    %c0_18 = arith.constant 0 : index
    %c0_19 = arith.constant 0 : index
    %40 = vector.load %arg7[%c0_17, %c0_18, %c0_19] : memref<5x8x128xf32, #tpu.memory_space<vmem>>, vector<1x8x128xf32>
    %41 = vector.shape_cast %40 : vector<1x8x128xf32> to vector<8x128xf32>
    %42 = vector.shape_cast %39 : vector<8x128xf32> to vector<1x8x128xf32>
    tpu.vector_store %arg7[%c0_17, %c0_18, %c0_19], %42 {strides = array<i32>} : memref<5x8x128xf32, #tpu.memory_space<vmem>>, vector<1x8x128xf32>,
    %c1 = arith.constant 1 : index
    %c0_20 = arith.constant 0 : index
    %c0_21 = arith.constant 0 : index
    %43 = vector.load %arg2[%c1, %c0_20, %c0_21] : memref<5x8x256xf32, #tpu.memory_space<vmem>>, vector<1x8x256xf32>
    %44 = vector.shape_cast %43 : vector<1x8x256xf32> to vector<8x256xf32>
    %c1_22 = arith.constant 1 : index
    %c0_23 = arith.constant 0 : index
    %c0_24 = arith.constant 0 : index
    %45 = vector.load %arg3[%c1_22, %c0_23, %c0_24] : memref<5x8x1xf32, #tpu.memory_space<vmem>>, vector<1x8x1xf32>
    %46 = vector.shape_cast %45 : vector<1x8x1xf32> to vector<8x1xf32>
    %cst_25 = arith.constant dense<0.000000e+00> : vector<8x256xf32>
    %47 = tpu.matmul %39, %4, %cst_25 {dimension_numbers = #tpu.dot_dimension_numbers<[1], [0], [0], [1], [0, 0, 1, 1], [], []>} : vector<8x128xf32>, vector<128x256xf32>, vector<8x256xf32> -> vector<8x256xf32>
    %48 = vector.extract_strided_slice %44 {offsets = [0, 0], sizes = [8, 128], strides = [1, 1]} : vector<8x256xf32> to vector<8x128xf32>
    %49 = vector.extract_strided_slice %47 {offsets = [0, 0], sizes = [8, 128], strides = [1, 1]} : vector<8x256xf32> to vector<8x128xf32>
    %50 = arith.addf %48, %49 : vector<8x128xf32>
    %51 = math.absf %50 : vector<8x128xf32>
    %cst_26 = arith.constant 0.000000e+00 : f32
    %52 = vector.broadcast %cst_26 : f32 to vector<8x128xf32>
    %53 = arith.subf %52, %51 : vector<8x128xf32>
    %54 = math.exp %53 : vector<8x128xf32>
    %cst_27 = arith.constant 1.000000e+00 : f32
    %55 = vector.broadcast %cst_27 : f32 to vector<8x128xf32>
    %56 = arith.addf %55, %54 : vector<8x128xf32>
    %cst_28 = arith.constant 1.000000e+00 : f32
    %57 = vector.broadcast %cst_28 : f32 to vector<8x128xf32>
    %58 = arith.divf %57, %56 : vector<8x128xf32>
    %cst_29 = arith.constant 0.000000e+00 : f32
    %59 = vector.broadcast %cst_29 : f32 to vector<8x128xf32>
    %60 = arith.cmpf oge, %50, %59 : vector<8x128xf32>
    %61 = arith.mulf %54, %58 : vector<8x128xf32>
    %62 = arith.select %60, %58, %61 : vector<8x128xi1>, vector<8x128xf32>
    %63 = vector.extract_strided_slice %44 {offsets = [0, 128], sizes = [8, 128], strides = [1, 1]} : vector<8x256xf32> to vector<8x128xf32>
    %64 = vector.extract_strided_slice %47 {offsets = [0, 128], sizes = [8, 128], strides = [1, 1]} : vector<8x256xf32> to vector<8x128xf32>
    %65 = vector.broadcast %5 : vector<1x128xf32> to vector<8x128xf32>
    %66 = arith.addf %64, %65 : vector<8x128xf32>
    %67 = arith.mulf %62, %66 : vector<8x128xf32>
    %68 = arith.addf %63, %67 : vector<8x128xf32>
    %69 = math.tanh %68 : vector<8x128xf32>
    %cst_30 = arith.constant 1.000000e+00 : f32
    %70 = vector.broadcast %cst_30 : f32 to vector<8x1xf32>
    %71 = arith.subf %70, %46 : vector<8x1xf32>
    %72 = vector.broadcast %71 : vector<8x1xf32> to vector<8x128xf32>
    %73 = arith.mulf %72, %39 : vector<8x128xf32>
    %74 = vector.broadcast %46 : vector<8x1xf32> to vector<8x128xf32>
    %75 = arith.mulf %74, %69 : vector<8x128xf32>
    %76 = arith.addf %73, %75 : vector<8x128xf32>
    %c1_31 = arith.constant 1 : index
    %c0_32 = arith.constant 0 : index
    %c0_33 = arith.constant 0 : index
    %77 = vector.load %arg7[%c1_31, %c0_32, %c0_33] : memref<5x8x128xf32, #tpu.memory_space<vmem>>, vector<1x8x128xf32>
    %78 = vector.shape_cast %77 : vector<1x8x128xf32> to vector<8x128xf32>
    %79 = vector.shape_cast %76 : vector<8x128xf32> to vector<1x8x128xf32>
    tpu.vector_store %arg7[%c1_31, %c0_32, %c0_33], %79 {strides = array<i32>} : memref<5x8x128xf32, #tpu.memory_space<vmem>>, vector<1x8x128xf32>,
    %c2 = arith.constant 2 : index
    %c0_34 = arith.constant 0 : index
    %c0_35 = arith.constant 0 : index
    %80 = vector.load %arg2[%c2, %c0_34, %c0_35] : memref<5x8x256xf32, #tpu.memory_space<vmem>>, vector<1x8x256xf32>
    %81 = vector.shape_cast %80 : vector<1x8x256xf32> to vector<8x256xf32>
    %c2_36 = arith.constant 2 : index
    %c0_37 = arith.constant 0 : index
    %c0_38 = arith.constant 0 : index
    %82 = vector.load %arg3[%c2_36, %c0_37, %c0_38] : memref<5x8x1xf32, #tpu.memory_space<vmem>>, vector<1x8x1xf32>
    %83 = vector.shape_cast %82 : vector<1x8x1xf32> to vector<8x1xf32>
    %cst_39 = arith.constant dense<0.000000e+00> : vector<8x256xf32>
    %84 = tpu.matmul %76, %4, %cst_39 {dimension_numbers = #tpu.dot_dimension_numbers<[1], [0], [0], [1], [0, 0, 1, 1], [], []>} : vector<8x128xf32>, vector<128x256xf32>, vector<8x256xf32> -> vector<8x256xf32>
    %85 = vector.extract_strided_slice %81 {offsets = [0, 0], sizes = [8, 128], strides = [1, 1]} : vector<8x256xf32> to vector<8x128xf32>
    %86 = vector.extract_strided_slice %84 {offsets = [0, 0], sizes = [8, 128], strides = [1, 1]} : vector<8x256xf32> to vector<8x128xf32>
    %87 = arith.addf %85, %86 : vector<8x128xf32>
    %88 = math.absf %87 : vector<8x128xf32>
    %cst_40 = arith.constant 0.000000e+00 : f32
    %89 = vector.broadcast %cst_40 : f32 to vector<8x128xf32>
    %90 = arith.subf %89, %88 : vector<8x128xf32>
    %91 = math.exp %90 : vector<8x128xf32>
    %cst_41 = arith.constant 1.000000e+00 : f32
    %92 = vector.broadcast %cst_41 : f32 to vector<8x128xf32>
    %93 = arith.addf %92, %91 : vector<8x128xf32>
    %cst_42 = arith.constant 1.000000e+00 : f32
    %94 = vector.broadcast %cst_42 : f32 to vector<8x128xf32>
    %95 = arith.divf %94, %93 : vector<8x128xf32>
    %cst_43 = arith.constant 0.000000e+00 : f32
    %96 = vector.broadcast %cst_43 : f32 to vector<8x128xf32>
    %97 = arith.cmpf oge, %87, %96 : vector<8x128xf32>
    %98 = arith.mulf %91, %95 : vector<8x128xf32>
    %99 = arith.select %97, %95, %98 : vector<8x128xi1>, vector<8x128xf32>
    %100 = vector.extract_strided_slice %81 {offsets = [0, 128], sizes = [8, 128], strides = [1, 1]} : vector<8x256xf32> to vector<8x128xf32>
    %101 = vector.extract_strided_slice %84 {offsets = [0, 128], sizes = [8, 128], strides = [1, 1]} : vector<8x256xf32> to vector<8x128xf32>
    %102 = vector.broadcast %5 : vector<1x128xf32> to vector<8x128xf32>
    %103 = arith.addf %101, %102 : vector<8x128xf32>
    %104 = arith.mulf %99, %103 : vector<8x128xf32>
    %105 = arith.addf %100, %104 : vector<8x128xf32>
    %106 = math.tanh %105 : vector<8x128xf32>
    %cst_44 = arith.constant 1.000000e+00 : f32
    %107 = vector.broadcast %cst_44 : f32 to vector<8x1xf32>
    %108 = arith.subf %107, %83 : vector<8x1xf32>
    %109 = vector.broadcast %108 : vector<8x1xf32> to vector<8x128xf32>
    %110 = arith.mulf %109, %76 : vector<8x128xf32>
    %111 = vector.broadcast %83 : vector<8x1xf32> to vector<8x128xf32>
    %112 = arith.mulf %111, %106 : vector<8x128xf32>
    %113 = arith.addf %110, %112 : vector<8x128xf32>
    %c2_45 = arith.constant 2 : index
    %c0_46 = arith.constant 0 : index
    %c0_47 = arith.constant 0 : index
    %114 = vector.load %arg7[%c2_45, %c0_46, %c0_47] : memref<5x8x128xf32, #tpu.memory_space<vmem>>, vector<1x8x128xf32>
    %115 = vector.shape_cast %114 : vector<1x8x128xf32> to vector<8x128xf32>
    %116 = vector.shape_cast %113 : vector<8x128xf32> to vector<1x8x128xf32>
    tpu.vector_store %arg7[%c2_45, %c0_46, %c0_47], %116 {strides = array<i32>} : memref<5x8x128xf32, #tpu.memory_space<vmem>>, vector<1x8x128xf32>,
    %c3 = arith.constant 3 : index
    %c0_48 = arith.constant 0 : index
    %c0_49 = arith.constant 0 : index
    %117 = vector.load %arg2[%c3, %c0_48, %c0_49] : memref<5x8x256xf32, #tpu.memory_space<vmem>>, vector<1x8x256xf32>
    %118 = vector.shape_cast %117 : vector<1x8x256xf32> to vector<8x256xf32>
    %c3_50 = arith.constant 3 : index
    %c0_51 = arith.constant 0 : index
    %c0_52 = arith.constant 0 : index
    %119 = vector.load %arg3[%c3_50, %c0_51, %c0_52] : memref<5x8x1xf32, #tpu.memory_space<vmem>>, vector<1x8x1xf32>
    %120 = vector.shape_cast %119 : vector<1x8x1xf32> to vector<8x1xf32>
    %cst_53 = arith.constant dense<0.000000e+00> : vector<8x256xf32>
    %121 = tpu.matmul %113, %4, %cst_53 {dimension_numbers = #tpu.dot_dimension_numbers<[1], [0], [0], [1], [0, 0, 1, 1], [], []>} : vector<8x128xf32>, vector<128x256xf32>, vector<8x256xf32> -> vector<8x256xf32>
    %122 = vector.extract_strided_slice %118 {offsets = [0, 0], sizes = [8, 128], strides = [1, 1]} : vector<8x256xf32> to vector<8x128xf32>
    %123 = vector.extract_strided_slice %121 {offsets = [0, 0], sizes = [8, 128], strides = [1, 1]} : vector<8x256xf32> to vector<8x128xf32>
    %124 = arith.addf %122, %123 : vector<8x128xf32>
    %125 = math.absf %124 : vector<8x128xf32>
    %cst_54 = arith.constant 0.000000e+00 : f32
    %126 = vector.broadcast %cst_54 : f32 to vector<8x128xf32>
    %127 = arith.subf %126, %125 : vector<8x128xf32>
    %128 = math.exp %127 : vector<8x128xf32>
    %cst_55 = arith.constant 1.000000e+00 : f32
    %129 = vector.broadcast %cst_55 : f32 to vector<8x128xf32>
    %130 = arith.addf %129, %128 : vector<8x128xf32>
    %cst_56 = arith.constant 1.000000e+00 : f32
    %131 = vector.broadcast %cst_56 : f32 to vector<8x128xf32>
    %132 = arith.divf %131, %130 : vector<8x128xf32>
    %cst_57 = arith.constant 0.000000e+00 : f32
    %133 = vector.broadcast %cst_57 : f32 to vector<8x128xf32>
    %134 = arith.cmpf oge, %124, %133 : vector<8x128xf32>
    %135 = arith.mulf %128, %132 : vector<8x128xf32>
    %136 = arith.select %134, %132, %135 : vector<8x128xi1>, vector<8x128xf32>
    %137 = vector.extract_strided_slice %118 {offsets = [0, 128], sizes = [8, 128], strides = [1, 1]} : vector<8x256xf32> to vector<8x128xf32>
    %138 = vector.extract_strided_slice %121 {offsets = [0, 128], sizes = [8, 128], strides = [1, 1]} : vector<8x256xf32> to vector<8x128xf32>
    %139 = vector.broadcast %5 : vector<1x128xf32> to vector<8x128xf32>
    %140 = arith.addf %138, %139 : vector<8x128xf32>
    %141 = arith.mulf %136, %140 : vector<8x128xf32>
    %142 = arith.addf %137, %141 : vector<8x128xf32>
    %143 = math.tanh %142 : vector<8x128xf32>
    %cst_58 = arith.constant 1.000000e+00 : f32
    %144 = vector.broadcast %cst_58 : f32 to vector<8x1xf32>
    %145 = arith.subf %144, %120 : vector<8x1xf32>
    %146 = vector.broadcast %145 : vector<8x1xf32> to vector<8x128xf32>
    %147 = arith.mulf %146, %113 : vector<8x128xf32>
    %148 = vector.broadcast %120 : vector<8x1xf32> to vector<8x128xf32>
    %149 = arith.mulf %148, %143 : vector<8x128xf32>
    %150 = arith.addf %147, %149 : vector<8x128xf32>
    %c3_59 = arith.constant 3 : index
    %c0_60 = arith.constant 0 : index
    %c0_61 = arith.constant 0 : index
    %151 = vector.load %arg7[%c3_59, %c0_60, %c0_61] : memref<5x8x128xf32, #tpu.memory_space<vmem>>, vector<1x8x128xf32>
    %152 = vector.shape_cast %151 : vector<1x8x128xf32> to vector<8x128xf32>
    %153 = vector.shape_cast %150 : vector<8x128xf32> to vector<1x8x128xf32>
    tpu.vector_store %arg7[%c3_59, %c0_60, %c0_61], %153 {strides = array<i32>} : memref<5x8x128xf32, #tpu.memory_space<vmem>>, vector<1x8x128xf32>,
    %c4 = arith.constant 4 : index
    %c0_62 = arith.constant 0 : index
    %c0_63 = arith.constant 0 : index
    %154 = vector.load %arg2[%c4, %c0_62, %c0_63] : memref<5x8x256xf32, #tpu.memory_space<vmem>>, vector<1x8x256xf32>
    %155 = vector.shape_cast %154 : vector<1x8x256xf32> to vector<8x256xf32>
    %c4_64 = arith.constant 4 : index
    %c0_65 = arith.constant 0 : index
    %c0_66 = arith.constant 0 : index
    %156 = vector.load %arg3[%c4_64, %c0_65, %c0_66] : memref<5x8x1xf32, #tpu.memory_space<vmem>>, vector<1x8x1xf32>
    %157 = vector.shape_cast %156 : vector<1x8x1xf32> to vector<8x1xf32>
    %cst_67 = arith.constant dense<0.000000e+00> : vector<8x256xf32>
    %158 = tpu.matmul %150, %4, %cst_67 {dimension_numbers = #tpu.dot_dimension_numbers<[1], [0], [0], [1], [0, 0, 1, 1], [], []>} : vector<8x128xf32>, vector<128x256xf32>, vector<8x256xf32> -> vector<8x256xf32>
    %159 = vector.extract_strided_slice %155 {offsets = [0, 0], sizes = [8, 128], strides = [1, 1]} : vector<8x256xf32> to vector<8x128xf32>
    %160 = vector.extract_strided_slice %158 {offsets = [0, 0], sizes = [8, 128], strides = [1, 1]} : vector<8x256xf32> to vector<8x128xf32>
    %161 = arith.addf %159, %160 : vector<8x128xf32>
    %162 = math.absf %161 : vector<8x128xf32>
    %cst_68 = arith.constant 0.000000e+00 : f32
    %163 = vector.broadcast %cst_68 : f32 to vector<8x128xf32>
    %164 = arith.subf %163, %162 : vector<8x128xf32>
    %165 = math.exp %164 : vector<8x128xf32>
    %cst_69 = arith.constant 1.000000e+00 : f32
    %166 = vector.broadcast %cst_69 : f32 to vector<8x128xf32>
    %167 = arith.addf %166, %165 : vector<8x128xf32>
    %cst_70 = arith.constant 1.000000e+00 : f32
    %168 = vector.broadcast %cst_70 : f32 to vector<8x128xf32>
    %169 = arith.divf %168, %167 : vector<8x128xf32>
    %cst_71 = arith.constant 0.000000e+00 : f32
    %170 = vector.broadcast %cst_71 : f32 to vector<8x128xf32>
    %171 = arith.cmpf oge, %161, %170 : vector<8x128xf32>
    %172 = arith.mulf %165, %169 : vector<8x128xf32>
    %173 = arith.select %171, %169, %172 : vector<8x128xi1>, vector<8x128xf32>
    %174 = vector.extract_strided_slice %155 {offsets = [0, 128], sizes = [8, 128], strides = [1, 1]} : vector<8x256xf32> to vector<8x128xf32>
    %175 = vector.extract_strided_slice %158 {offsets = [0, 128], sizes = [8, 128], strides = [1, 1]} : vector<8x256xf32> to vector<8x128xf32>
    %176 = vector.broadcast %5 : vector<1x128xf32> to vector<8x128xf32>
    %177 = arith.addf %175, %176 : vector<8x128xf32>
    %178 = arith.mulf %173, %177 : vector<8x128xf32>
    %179 = arith.addf %174, %178 : vector<8x128xf32>
    %180 = math.tanh %179 : vector<8x128xf32>
    %cst_72 = arith.constant 1.000000e+00 : f32
    %181 = vector.broadcast %cst_72 : f32 to vector<8x1xf32>
    %182 = arith.subf %181, %157 : vector<8x1xf32>
    %183 = vector.broadcast %182 : vector<8x1xf32> to vector<8x128xf32>
    %184 = arith.mulf %183, %150 : vector<8x128xf32>
    %185 = vector.broadcast %157 : vector<8x1xf32> to vector<8x128xf32>
    %186 = arith.mulf %185, %180 : vector<8x128xf32>
    %187 = arith.addf %184, %186 : vector<8x128xf32>
    %c4_73 = arith.constant 4 : index
    %c0_74 = arith.constant 0 : index
    %c0_75 = arith.constant 0 : index
    %188 = vector.load %arg7[%c4_73, %c0_74, %c0_75] : memref<5x8x128xf32, #tpu.memory_space<vmem>>, vector<1x8x128xf32>
    %189 = vector.shape_cast %188 : vector<1x8x128xf32> to vector<8x128xf32>
    %190 = vector.shape_cast %187 : vector<8x128xf32> to vector<1x8x128xf32>
    tpu.vector_store %arg7[%c4_73, %c0_74, %c0_75], %190 {strides = array<i32>} : memref<5x8x128xf32, #tpu.memory_space<vmem>>, vector<1x8x128xf32>,
    %c0_76 = arith.constant 0 : index
    %c0_77 = arith.constant 0 : index
    %191 = vector.load %arg8[%c0_76, %c0_77] : memref<8x128xf32, #tpu.memory_space<vmem>>, vector<8x128xf32>
    tpu.vector_store %arg8[%c0_76, %c0_77], %187 {strides = array<i32>} : memref<8x128xf32, #tpu.memory_space<vmem>>, vector<8x128xf32>,
    return
  }
  func.func @transform_0(%arg0: i32, %arg1: i32) -> (i32, i32, i32) {
    %c0_i32 = arith.constant 0 : i32
    %c0_i32_0 = arith.constant 0 : i32
    return %arg1, %arg0, %c0_i32 : i32, i32, i32
  }
  func.func @transform_1(%arg0: i32, %arg1: i32) -> (i32, i32, i32) {
    %c0_i32 = arith.constant 0 : i32
    %c0_i32_0 = arith.constant 0 : i32
    return %arg1, %arg0, %c0_i32 : i32, i32, i32
  }
  func.func @transform_2(%arg0: i32, %arg1: i32) -> (i32, i32) {
    %c0_i32 = arith.constant 0 : i32
    %c0_i32_0 = arith.constant 0 : i32
    return %arg0, %c0_i32 : i32, i32
  }
  func.func @transform_3(%arg0: i32, %arg1: i32) -> (i32, i32) {
    %c0_i32 = arith.constant 0 : i32
    %c0_i32_0 = arith.constant 0 : i32
    %c0_i32_1 = arith.constant 0 : i32
    return %c0_i32, %c0_i32_0 : i32, i32
  }
  func.func @transform_4(%arg0: i32, %arg1: i32) -> (i32, i32) {
    %c0_i32 = arith.constant 0 : i32
    %c0_i32_0 = arith.constant 0 : i32
    %c0_i32_1 = arith.constant 0 : i32
    return %c0_i32, %c0_i32_0 : i32, i32
  }
  func.func @transform_5(%arg0: i32, %arg1: i32) -> (i32, i32, i32) {
    %c0_i32 = arith.constant 0 : i32
    %c0_i32_0 = arith.constant 0 : i32
    return %arg1, %arg0, %c0_i32 : i32, i32, i32
  }
}

</mosaic_0001>

<llo_original>
// kernel: tpu_custom_call.1
$region0: #{tpu_custom_call.1}
  #allocation0 [shape = 'u32[]', space=smem, size = 0x4, offset = 0x4, fixed_abs, tag = 'smem constant byte address 0x4 - core index']
  #allocation1 [shape = 'u32[144,128]{1,0:T(1,128)}', space=vmem, size = 0x12000, scoped, tag = 'internal scratch']
  #allocation2 [shape = 'f32[8,128]{1,0:T(8,128)}', space=vmem, size = 0x1000, scoped, tag = 'scratch operand']
  %s0 = inlined_call_operand.hbm [shape: f32[5,8,256], index: 0, kind: input, shape index: {}]
  %s1 = inlined_call_operand.vmem [shape: f32[5,8,1], index: 1, kind: input, shape index: {}]
  %s2 = inlined_call_operand.vmem [shape: f32[8,128], index: 2, kind: input, shape index: {}]
  %s3 = inlined_call_operand.hbm [shape: f32[128,256], index: 3, kind: input, shape index: {}]
  %s4 = inlined_call_operand.vmem [shape: f32[1,128], index: 4, kind: input, shape index: {}]
  %s5 = inlined_call_operand.hbm [shape: f32[5,8,128], index: 5, kind: output, shape index: {}]
  %s6 = sld [smem:[#allocation0]]
  $region42: #{tpu_custom_call.1} parent=0
    _
  %s8 = ssub.s32 1, %s6
  %s9 = scalar_select 0, %s8, %s6
  $region1: #{tpu_custom_call.1} parent=0
    #allocation3 [shape = 'u8[40960]{0}', space=vmem, size = 0xa000, scoped, tag = 'input window, operand 0, single buffered']
    #allocation4 [shape = 's32[1]{0}', space=sflag, size = 0x4, scoped, tag = 'scoped memory for tpu_custom_call.1']
    #allocation5 [shape = 's32[1]{0}', space=sflag, size = 0x4, scoped, tag = 'scoped memory for tpu_custom_call.1']
    #allocation6 [shape = 'u8[131072]{0}', space=vmem, size = 0x20000, scoped, tag = 'input window, operand 3, single buffered']
    #allocation7 [shape = 's32[1]{0}', space=sflag, size = 0x4, scoped, tag = 'scoped memory for tpu_custom_call.1']
    #allocation8 [shape = 'u8[20480]{0}', space=vmem, size = 0x5000, scoped, tag = 'output window, operand 0, single buffered']
    %10 = vsyncpa [#allocation4], 0
    %11 = vsyncpa [#allocation7], 0
    %12 = vsyncpa [#allocation5], 0
    // Predicated region
    $region2: #{tpu_custom_call.1} parent=1 // pred_check
      _
    $region3: #{tpu_custom_call.1} parent=1 // pred_check_branch
      %14 = sbr.rel (0) target = $region5
    $region4: #{tpu_custom_call.1} parent=1 // pred_region
      %s16 = ssub.s32 1280, 1280
      %17 = vsyncadd [#allocation4], %s16
      %s18 = sshll.u32 [#allocation3], 4
      %s19 = int_to_ptr.vmem [resolvable:$true] %s18
      %24 = dma.hbm_to_vmem [thread:$0]  %s0, 1280, %s19, [#allocation4], 256, 256, 16
    $region5: #{tpu_custom_call.1} parent=1 // pred_fallthru
      _
    // Predicated region
    $region6: #{tpu_custom_call.1} parent=1 // pred_check
      _
    $region7: #{tpu_custom_call.1} parent=1 // pred_check_branch
      %26 = sbr.rel (0) target = $region9
    $region8: #{tpu_custom_call.1} parent=1 // pred_region
      _
    $region9: #{tpu_custom_call.1} parent=1 // pred_fallthru
      _
    // Predicated region
    $region10: #{tpu_custom_call.1} parent=1 // pred_check
      _
    $region11: #{tpu_custom_call.1} parent=1 // pred_check_branch
      %28 = sbr.rel (0) target = $region13
    $region12: #{tpu_custom_call.1} parent=1 // pred_region
      _
    $region13: #{tpu_custom_call.1} parent=1 // pred_fallthru
      _
    // Predicated region
    $region14: #{tpu_custom_call.1} parent=1 // pred_check
      _
    $region15: #{tpu_custom_call.1} parent=1 // pred_check_branch
      %30 = sbr.rel (0) target = $region17
    $region16: #{tpu_custom_call.1} parent=1 // pred_region
      %s32 = ssub.s32 4096, 4096
      %33 = vsyncadd [#allocation7], %s32
      %s34 = sshll.u32 [#allocation6], 4
      %s35 = int_to_ptr.vmem [resolvable:$true] %s34
      %40 = dma.hbm_to_vmem [thread:$0]  %s3, 4096, %s35, [#allocation7], 256, 256, 16
    $region17: #{tpu_custom_call.1} parent=1 // pred_fallthru
      _
    // Predicated region
    $region18: #{tpu_custom_call.1} parent=1 // pred_check
      _
    $region19: #{tpu_custom_call.1} parent=1 // pred_check_branch
      %42 = sbr.rel (0) target = $region21
    $region20: #{tpu_custom_call.1} parent=1 // pred_region
      _
    $region21: #{tpu_custom_call.1} parent=1 // pred_fallthru
      _
    // Predicated region
    $region22: #{tpu_custom_call.1} parent=1 // pred_check
      _
    $region23: #{tpu_custom_call.1} parent=1 // pred_check_branch
      %44 = sbr.rel (0) target = $region25
    $region24: #{tpu_custom_call.1} parent=1 // pred_region
      %45 = dma.done [#allocation4], 1280
    $region25: #{tpu_custom_call.1} parent=1 // pred_fallthru
      _
    // Predicated region
    $region26: #{tpu_custom_call.1} parent=1 // pred_check
      _
    $region27: #{tpu_custom_call.1} parent=1 // pred_check_branch
      %47 = sbr.rel (0) target = $region29
    $region28: #{tpu_custom_call.1} parent=1 // pred_region
      %48 = dma.done [#allocation7], 4096
    $region29: #{tpu_custom_call.1} parent=1 // pred_fallthru
      _
    %p49 = scmp.eq.s32.totalorder 0, 0
    // Predicated region
    $region30: #{tpu_custom_call.1} parent=1 // pred_check
      %p50 = pneg %p49
    $region31: #{tpu_custom_call.1} parent=1 // pred_check_branch
      %52 = sbr.rel (%p50) target = $region33
    $region32: #{tpu_custom_call.1} parent=1 // pred_region
      %v53 = vld [vmem:[%s2] sm:$0xff]
      %54 = vst [vmem:[#allocation2] sm:$0xff] %v53
    $region33: #{tpu_custom_call.1} parent=1 // pred_fallthru
      _
    %v55 = vld [vmem:[#allocation2] sm:$0xff]
    %v56 = vld [vmem:[#allocation6] sm:$0xff]
    %v57 = vld [vmem:[#allocation6 + $0x8] sm:$0xff]
    %v58 = vld [vmem:[#allocation6 + $0x10] sm:$0xff]
    %v59 = vld [vmem:[#allocation6 + $0x18] sm:$0xff]
    %v60 = vld [vmem:[#allocation6 + $0x20] sm:$0xff]
    %v61 = vld [vmem:[#allocation6 + $0x28] sm:$0xff]
    %v62 = vld [vmem:[#allocation6 + $0x30] sm:$0xff]
    %v63 = vld [vmem:[#allocation6 + $0x38] sm:$0xff]
    %v64 = vld [vmem:[#allocation6 + $0x40] sm:$0xff]
    %v65 = vld [vmem:[#allocation6 + $0x48] sm:$0xff]
    %v66 = vld [vmem:[#allocation6 + $0x50] sm:$0xff]
    %v67 = vld [vmem:[#allocation6 + $0x58] sm:$0xff]
    %v68 = vld [vmem:[#allocation6 + $0x60] sm:$0xff]
    %v69 = vld [vmem:[#allocation6 + $0x68] sm:$0xff]
    %v70 = vld [vmem:[#allocation6 + $0x70] sm:$0xff]
    %v71 = vld [vmem:[#allocation6 + $0x78] sm:$0xff]
    %v72 = vld [vmem:[#allocation6 + $0x80] sm:$0xff]
    %v73 = vld [vmem:[#allocation6 + $0x88] sm:$0xff]
    %v74 = vld [vmem:[#allocation6 + $0x90] sm:$0xff]
    %v75 = vld [vmem:[#allocation6 + $0x98] sm:$0xff]
    %v76 = vld [vmem:[#allocation6 + $0xa0] sm:$0xff]
    %v77 = vld [vmem:[#allocation6 + $0xa8] sm:$0xff]
    %v78 = vld [vmem:[#allocation6 + $0xb0] sm:$0xff]
    %v79 = vld [vmem:[#allocation6 + $0xb8] sm:$0xff]
    %v80 = vld [vmem:[#allocation6 + $0xc0] sm:$0xff]
    %v81 = vld [vmem:[#allocation6 + $0xc8] sm:$0xff]
    %v82 = vld [vmem:[#allocation6 + $0xd0] sm:$0xff]
    %v83 = vld [vmem:[#allocation6 + $0xd8] sm:$0xff]
    %v84 = vld [vmem:[#allocation6 + $0xe0] sm:$0xff]
    %v85 = vld [vmem:[#allocation6 + $0xe8] sm:$0xff]
    %v86 = vld [vmem:[#allocation6 + $0xf0] sm:$0xff]
    %v87 = vld [vmem:[#allocation6 + $0xf8] sm:$0xff]
    %v88 = vld [vmem:[%s4] sm:$0x1]
    %v89 = vld [vmem:[#allocation3] sm:$0xff]
    %v90 = vld [vmem:[#allocation3 + $0x8] sm:$0xff]
    %v91 = vld [vmem:[%s1] sm:$0xff]
    %92 = vmatprep.subr.mxu0 %v87
    %93 = vmatpush1.msra.mxu0 %v86
    %94 = vmatprep.subr.mxu0 %v85
    %95 = vmatpush1.msra.mxu0 %v84
    %96 = vmatprep.subr.mxu0 %v83
    %97 = vmatpush1.msra.mxu0 %v82
    %98 = vmatprep.subr.mxu0 %v81
    %99 = vmatpush1.msra.mxu0 %v80
    %100 = vmatprep.subr.mxu0 %v79
    %101 = vmatpush1.msra.mxu0 %v78
    %102 = vmatprep.subr.mxu0 %v77
    %103 = vmatpush1.msra.mxu0 %v76
    %104 = vmatprep.subr.mxu0 %v75
    %105 = vmatpush1.msra.mxu0 %v74
    %106 = vmatprep.subr.mxu0 %v73
    %107 = vmatpush1.msra.mxu0 %v72
    %108 = vmatprep.subr.mxu0 %v71
    %109 = vmatpush1.msra.mxu0 %v70
    %110 = vmatprep.subr.mxu0 %v69
    %111 = vmatpush1.msra.mxu0 %v68
    %112 = vmatprep.subr.mxu0 %v67
    %113 = vmatpush1.msra.mxu0 %v66
    %114 = vmatprep.subr.mxu0 %v65
    %115 = vmatpush1.msra.mxu0 %v64
    %116 = vmatprep.subr.mxu0 %v63
    %117 = vmatpush1.msra.mxu0 %v62
    %118 = vmatprep.subr.mxu0 %v61
    %119 = vmatpush1.msra.mxu0 %v60
    %120 = vmatprep.subr.mxu0 %v59
    %121 = vmatpush1.msra.mxu0 %v58
    %122 = vmatprep.subr.mxu0 %v57
    %123 = vmatpush1.msra.mxu0 %v56
    %124 = vmatprep.subr.mxu0 0.0
    %125 = vmatpush2.msra.mxu0 0.0
    %126 = vmatprep.subr.mxu0 0.0
    %127 = vmatpush2.msra.mxu0 0.0
    %128 = vmatprep.subr.mxu0 0.0
    %129 = vmatpush2.msra.mxu0 0.0
    %130 = vmatprep.subr.mxu0 0.0
    %131 = vmatpush2.msra.mxu0 0.0
    %132 = vmatprep.subr.mxu0 0.0
    %133 = vmatpush2.msra.mxu0 0.0
    %134 = vmatprep.subr.mxu0 0.0
    %135 = vmatpush2.msra.mxu0 0.0
    %136 = vmatprep.subr.mxu0 0.0
    %137 = vmatpush2.msra.mxu0 0.0
    %138 = vmatprep.subr.mxu0 0.0
    %139 = vmatpush2.msra.mxu0 0.0
    %140 = vmatprep.subr.mxu0 0.0
    %141 = vmatpush2.msra.mxu0 0.0
    %142 = vmatprep.subr.mxu0 0.0
    %143 = vmatpush2.msra.mxu0 0.0
    %144 = vmatprep.subr.mxu0 0.0
    %145 = vmatpush2.msra.mxu0 0.0
    %146 = vmatprep.subr.mxu0 0.0
    %147 = vmatpush2.msra.mxu0 0.0
    %148 = vmatprep.subr.mxu0 0.0
    %149 = vmatpush2.msra.mxu0 0.0
    %150 = vmatprep.subr.mxu0 0.0
    %151 = vmatpush2.msra.mxu0 0.0
    %152 = vmatprep.subr.mxu0 0.0
    %153 = vmatpush2.msra.mxu0 0.0
    %154 = vmatprep.subr.mxu0 0.0
    %155 = vmatpush2.msra.mxu0 0.0
    %156 = vmatprep.mubr.f32.mxu0 0.0
    %157 = vmatmul.mubr.f32.gmra.mxu0 %v55
    %v158 = vpop.f32.mrf.mxu0
    %v159 = vadd.f32 0.0, %v158
    %v160 = vpop.f32.mrf.mxu0
    %v161 = vadd.f32 0.0, %v160
    %162 = vdwg.mxu0
    %v163 = vadd.f32 %v89, %v159
    %v164 = vand.u32 2147483647, %v163
    %v165 = vsub.f32 0.0, %v164
    %v166 = vmul.f32 %v165, 1.442695
    %v167 = vpow.pop %v166
    %v168 = vadd.f32 %v167, 1.0
    %v169 = vrcp.pop %v168
    %v170 = vmul.f32 1.0, %v169
    %vm171 = vcmp.ge.f32.partialorder %v163, 0.0
    %v172 = vmul.f32 %v167, %v170
    %v173 = vsel %vm171, %v170, %v172
    %v175 = vlaneseq
    %v176 = vshrl.u32 %v175, 7
    %v177 = vsub.s32 0, %v176
    %v178 = vrot.slane %v88, %v177
    %v180 = vadd.f32 %v161, %v178
    %v181 = vmul.f32 %v173, %v180
    %v182 = vadd.f32 %v90, %v181
    %v183 = vtanh.pop %v182
    %v184 = vsub.f32 1.0, %v91
    %186 = vset.pattern.permute.xlu0 0
    %187 = vperm.xlu0 %186, %v184
    %v188 = vpop.permute.xlu0 %187
    %v190 = vmul.f32 %v188, %v55
    %192 = vset.pattern.permute.xlu0 0
    %193 = vperm.xlu0 %192, %v91
    %v194 = vpop.permute.xlu0 %193
    %v196 = vmul.f32 %v194, %v183
    %v197 = vadd.f32 %v190, %v196
    %198 = vst [vmem:[#allocation8] sm:$0xff] %v197
    %s199 = scalar_lea.vmem [#allocation3], 16
    %v200 = vld [vmem:[%s199] sm:$0xff]
    %v201 = vld [vmem:[%s199 + $0x8] sm:$0xff]
    %s202 = scalar_lea.vmem %s1, 8
    %v203 = vld [vmem:[%s202] sm:$0xff]
    %204 = vmatprep.subr.mxu0 %v87
    %205 = vmatpush1.msra.mxu0 %v86
    %206 = vmatprep.subr.mxu0 %v85
    %207 = vmatpush1.msra.mxu0 %v84
    %208 = vmatprep.subr.mxu0 %v83
    %209 = vmatpush1.msra.mxu0 %v82
    %210 = vmatprep.subr.mxu0 %v81
    %211 = vmatpush1.msra.mxu0 %v80
    %212 = vmatprep.subr.mxu0 %v79
    %213 = vmatpush1.msra.mxu0 %v78
    %214 = vmatprep.subr.mxu0 %v77
    %215 = vmatpush1.msra.mxu0 %v76
    %216 = vmatprep.subr.mxu0 %v75
    %217 = vmatpush1.msra.mxu0 %v74
    %218 = vmatprep.subr.mxu0 %v73
    %219 = vmatpush1.msra.mxu0 %v72
    %220 = vmatprep.subr.mxu0 %v71
    %221 = vmatpush1.msra.mxu0 %v70
    %222 = vmatprep.subr.mxu0 %v69
    %223 = vmatpush1.msra.mxu0 %v68
    %224 = vmatprep.subr.mxu0 %v67
    %225 = vmatpush1.msra.mxu0 %v66
    %226 = vmatprep.subr.mxu0 %v65
    %227 = vmatpush1.msra.mxu0 %v64
    %228 = vmatprep.subr.mxu0 %v63
    %229 = vmatpush1.msra.mxu0 %v62
    %230 = vmatprep.subr.mxu0 %v61
    %231 = vmatpush1.msra.mxu0 %v60
    %232 = vmatprep.subr.mxu0 %v59
    %233 = vmatpush1.msra.mxu0 %v58
    %234 = vmatprep.subr.mxu0 %v57
    %235 = vmatpush1.msra.mxu0 %v56
    %236 = vmatprep.subr.mxu0 0.0
    %237 = vmatpush2.msra.mxu0 0.0
    %238 = vmatprep.subr.mxu0 0.0
    %239 = vmatpush2.msra.mxu0 0.0
    %240 = vmatprep.subr.mxu0 0.0
    %241 = vmatpush2.msra.mxu0 0.0
    %242 = vmatprep.subr.mxu0 0.0
    %243 = vmatpush2.msra.mxu0 0.0
    %244 = vmatprep.subr.mxu0 0.0
    %245 = vmatpush2.msra.mxu0 0.0
    %246 = vmatprep.subr.mxu0 0.0
    %247 = vmatpush2.msra.mxu0 0.0
    %248 = vmatprep.subr.mxu0 0.0
    %249 = vmatpush2.msra.mxu0 0.0
    %250 = vmatprep.subr.mxu0 0.0
    %251 = vmatpush2.msra.mxu0 0.0
    %252 = vmatprep.subr.mxu0 0.0
    %253 = vmatpush2.msra.mxu0 0.0
    %254 = vmatprep.subr.mxu0 0.0
    %255 = vmatpush2.msra.mxu0 0.0
    %256 = vmatprep.subr.mxu0 0.0
    %257 = vmatpush2.msra.mxu0 0.0
    %258 = vmatprep.subr.mxu0 0.0
    %259 = vmatpush2.msra.mxu0 0.0
    %260 = vmatprep.subr.mxu0 0.0
    %261 = vmatpush2.msra.mxu0 0.0
    %262 = vmatprep.subr.mxu0 0.0
    %263 = vmatpush2.msra.mxu0 0.0
    %264 = vmatprep.subr.mxu0 0.0
    %265 = vmatpush2.msra.mxu0 0.0
    %266 = vmatprep.subr.mxu0 0.0
    %267 = vmatpush2.msra.mxu0 0.0
    %268 = vmatprep.mubr.f32.mxu0 0.0
    %269 = vmatmul.mubr.f32.gmra.mxu0 %v197
    %v270 = vpop.f32.mrf.mxu0
    %v271 = vadd.f32 0.0, %v270
    %v272 = vpop.f32.mrf.mxu0
    %v273 = vadd.f32 0.0, %v272
    %274 = vdwg.mxu0
    %v275 = vadd.f32 %v200, %v271
    %v276 = vand.u32 2147483647, %v275
    %v277 = vsub.f32 0.0, %v276
    %v278 = vmul.f32 %v277, 1.442695
    %v279 = vpow.pop %v278
    %v280 = vadd.f32 %v279, 1.0
    %v281 = vrcp.pop %v280
    %v282 = vmul.f32 1.0, %v281
    %vm283 = vcmp.ge.f32.partialorder %v275, 0.0
    %v284 = vmul.f32 %v279, %v282
    %v285 = vsel %vm283, %v282, %v284
    %v286 = vadd.f32 %v273, %v178
    %v287 = vmul.f32 %v285, %v286
    %v288 = vadd.f32 %v201, %v287
    %v289 = vtanh.pop %v288
    %v290 = vsub.f32 1.0, %v203
    %292 = vset.pattern.permute.xlu0 0
    %293 = vperm.xlu0 %292, %v290
    %v294 = vpop.permute.xlu0 %293
    %v296 = vmul.f32 %v294, %v197
    %298 = vset.pattern.permute.xlu0 0
    %299 = vperm.xlu0 %298, %v203
    %v300 = vpop.permute.xlu0 %299
    %v302 = vmul.f32 %v300, %v289
    %v303 = vadd.f32 %v296, %v302
    %s304 = scalar_lea.vmem [#allocation8], 8
    %305 = vst [vmem:[%s304] sm:$0xff] %v303
    %s306 = scalar_lea.vmem [#allocation3], 32
    %v307 = vld [vmem:[%s306] sm:$0xff]
    %v308 = vld [vmem:[%s306 + $0x8] sm:$0xff]
    %s309 = scalar_lea.vmem %s1, 16
    %v310 = vld [vmem:[%s309] sm:$0xff]
    %311 = vmatprep.subr.mxu0 %v87
    %312 = vmatpush1.msra.mxu0 %v86
    %313 = vmatprep.subr.mxu0 %v85
    %314 = vmatpush1.msra.mxu0 %v84
    %315 = vmatprep.subr.mxu0 %v83
    %316 = vmatpush1.msra.mxu0 %v82
    %317 = vmatprep.subr.mxu0 %v81
    %318 = vmatpush1.msra.mxu0 %v80
    %319 = vmatprep.subr.mxu0 %v79
    %320 = vmatpush1.msra.mxu0 %v78
    %321 = vmatprep.subr.mxu0 %v77
    %322 = vmatpush1.msra.mxu0 %v76
    %323 = vmatprep.subr.mxu0 %v75
    %324 = vmatpush1.msra.mxu0 %v74
    %325 = vmatprep.subr.mxu0 %v73
    %326 = vmatpush1.msra.mxu0 %v72
    %327 = vmatprep.subr.mxu0 %v71
    %328 = vmatpush1.msra.mxu0 %v70
    %329 = vmatprep.subr.mxu0 %v69
    %330 = vmatpush1.msra.mxu0 %v68
    %331 = vmatprep.subr.mxu0 %v67
    %332 = vmatpush1.msra.mxu0 %v66
    %333 = vmatprep.subr.mxu0 %v65
    %334 = vmatpush1.msra.mxu0 %v64
    %335 = vmatprep.subr.mxu0 %v63
    %336 = vmatpush1.msra.mxu0 %v62
    %337 = vmatprep.subr.mxu0 %v61
    %338 = vmatpush1.msra.mxu0 %v60
    %339 = vmatprep.subr.mxu0 %v59
    %340 = vmatpush1.msra.mxu0 %v58
    %341 = vmatprep.subr.mxu0 %v57
    %342 = vmatpush1.msra.mxu0 %v56
    %343 = vmatprep.subr.mxu0 0.0
    %344 = vmatpush2.msra.mxu0 0.0
    %345 = vmatprep.subr.mxu0 0.0
    %346 = vmatpush2.msra.mxu0 0.0
    %347 = vmatprep.subr.mxu0 0.0
    %348 = vmatpush2.msra.mxu0 0.0
    %349 = vmatprep.subr.mxu0 0.0
    %350 = vmatpush2.msra.mxu0 0.0
    %351 = vmatprep.subr.mxu0 0.0
    %352 = vmatpush2.msra.mxu0 0.0
    %353 = vmatprep.subr.mxu0 0.0
    %354 = vmatpush2.msra.mxu0 0.0
    %355 = vmatprep.subr.mxu0 0.0
    %356 = vmatpush2.msra.mxu0 0.0
    %357 = vmatprep.subr.mxu0 0.0
    %358 = vmatpush2.msra.mxu0 0.0
    %359 = vmatprep.subr.mxu0 0.0
    %360 = vmatpush2.msra.mxu0 0.0
    %361 = vmatprep.subr.mxu0 0.0
    %362 = vmatpush2.msra.mxu0 0.0
    %363 = vmatprep.subr.mxu0 0.0
    %364 = vmatpush2.msra.mxu0 0.0
    %365 = vmatprep.subr.mxu0 0.0
    %366 = vmatpush2.msra.mxu0 0.0
    %367 = vmatprep.subr.mxu0 0.0
    %368 = vmatpush2.msra.mxu0 0.0
    %369 = vmatprep.subr.mxu0 0.0
    %370 = vmatpush2.msra.mxu0 0.0
    %371 = vmatprep.subr.mxu0 0.0
    %372 = vmatpush2.msra.mxu0 0.0
    %373 = vmatprep.subr.mxu0 0.0
    %374 = vmatpush2.msra.mxu0 0.0
    %375 = vmatprep.mubr.f32.mxu0 0.0
    %376 = vmatmul.mubr.f32.gmra.mxu0 %v303
    %v377 = vpop.f32.mrf.mxu0
    %v378 = vadd.f32 0.0, %v377
    %v379 = vpop.f32.mrf.mxu0
    %v380 = vadd.f32 0.0, %v379
    %381 = vdwg.mxu0
    %v382 = vadd.f32 %v307, %v378
    %v383 = vand.u32 2147483647, %v382
    %v384 = vsub.f32 0.0, %v383
    %v385 = vmul.f32 %v384, 1.442695
    %v386 = vpow.pop %v385
    %v387 = vadd.f32 %v386, 1.0
    %v388 = vrcp.pop %v387
    %v389 = vmul.f32 1.0, %v388
    %vm390 = vcmp.ge.f32.partialorder %v382, 0.0
    %v391 = vmul.f32 %v386, %v389
    %v392 = vsel %vm390, %v389, %v391
    %v393 = vadd.f32 %v380, %v178
    %v394 = vmul.f32 %v392, %v393
    %v395 = vadd.f32 %v308, %v394
    %v396 = vtanh.pop %v395
    %v397 = vsub.f32 1.0, %v310
    %399 = vset.pattern.permute.xlu0 0
    %400 = vperm.xlu0 %399, %v397
    %v401 = vpop.permute.xlu0 %400
    %v403 = vmul.f32 %v401, %v303
    %405 = vset.pattern.permute.xlu0 0
    %406 = vperm.xlu0 %405, %v310
    %v407 = vpop.permute.xlu0 %406
    %v409 = vmul.f32 %v407, %v396
    %v410 = vadd.f32 %v403, %v409
    %s411 = scalar_lea.vmem [#allocation8], 16
    %412 = vst [vmem:[%s411] sm:$0xff] %v410
    %s413 = scalar_lea.vmem [#allocation3], 48
    %v414 = vld [vmem:[%s413] sm:$0xff]
    %v415 = vld [vmem:[%s413 + $0x8] sm:$0xff]
    %s416 = scalar_lea.vmem %s1, 24
    %v417 = vld [vmem:[%s416] sm:$0xff]
    %418 = vmatprep.subr.mxu0 %v87
    %419 = vmatpush1.msra.mxu0 %v86
    %420 = vmatprep.subr.mxu0 %v85
    %421 = vmatpush1.msra.mxu0 %v84
    %422 = vmatprep.subr.mxu0 %v83
    %423 = vmatpush1.msra.mxu0 %v82
    %424 = vmatprep.subr.mxu0 %v81
    %425 = vmatpush1.msra.mxu0 %v80
    %426 = vmatprep.subr.mxu0 %v79
    %427 = vmatpush1.msra.mxu0 %v78
    %428 = vmatprep.subr.mxu0 %v77
    %429 = vmatpush1.msra.mxu0 %v76
    %430 = vmatprep.subr.mxu0 %v75
    %431 = vmatpush1.msra.mxu0 %v74
    %432 = vmatprep.subr.mxu0 %v73
    %433 = vmatpush1.msra.mxu0 %v72
    %434 = vmatprep.subr.mxu0 %v71
    %435 = vmatpush1.msra.mxu0 %v70
    %436 = vmatprep.subr.mxu0 %v69
    %437 = vmatpush1.msra.mxu0 %v68
    %438 = vmatprep.subr.mxu0 %v67
    %439 = vmatpush1.msra.mxu0 %v66
    %440 = vmatprep.subr.mxu0 %v65
    %441 = vmatpush1.msra.mxu0 %v64
    %442 = vmatprep.subr.mxu0 %v63
    %443 = vmatpush1.msra.mxu0 %v62
    %444 = vmatprep.subr.mxu0 %v61
    %445 = vmatpush1.msra.mxu0 %v60
    %446 = vmatprep.subr.mxu0 %v59
    %447 = vmatpush1.msra.mxu0 %v58
    %448 = vmatprep.subr.mxu0 %v57
    %449 = vmatpush1.msra.mxu0 %v56
    %450 = vmatprep.subr.mxu0 0.0
    %451 = vmatpush2.msra.mxu0 0.0
    %452 = vmatprep.subr.mxu0 0.0
    %453 = vmatpush2.msra.mxu0 0.0
    %454 = vmatprep.subr.mxu0 0.0
    %455 = vmatpush2.msra.mxu0 0.0
    %456 = vmatprep.subr.mxu0 0.0
    %457 = vmatpush2.msra.mxu0 0.0
    %458 = vmatprep.subr.mxu0 0.0
    %459 = vmatpush2.msra.mxu0 0.0
    %460 = vmatprep.subr.mxu0 0.0
    %461 = vmatpush2.msra.mxu0 0.0
    %462 = vmatprep.subr.mxu0 0.0
    %463 = vmatpush2.msra.mxu0 0.0
    %464 = vmatprep.subr.mxu0 0.0
    %465 = vmatpush2.msra.mxu0 0.0
    %466 = vmatprep.subr.mxu0 0.0
    %467 = vmatpush2.msra.mxu0 0.0
    %468 = vmatprep.subr.mxu0 0.0
    %469 = vmatpush2.msra.mxu0 0.0
    %470 = vmatprep.subr.mxu0 0.0
    %471 = vmatpush2.msra.mxu0 0.0
    %472 = vmatprep.subr.mxu0 0.0
    %473 = vmatpush2.msra.mxu0 0.0
    %474 = vmatprep.subr.mxu0 0.0
    %475 = vmatpush2.msra.mxu0 0.0
    %476 = vmatprep.subr.mxu0 0.0
    %477 = vmatpush2.msra.mxu0 0.0
    %478 = vmatprep.subr.mxu0 0.0
    %479 = vmatpush2.msra.mxu0 0.0
    %480 = vmatprep.subr.mxu0 0.0
    %481 = vmatpush2.msra.mxu0 0.0
    %482 = vmatprep.mubr.f32.mxu0 0.0
    %483 = vmatmul.mubr.f32.gmra.mxu0 %v410
    %v484 = vpop.f32.mrf.mxu0
    %v485 = vadd.f32 0.0, %v484
    %v486 = vpop.f32.mrf.mxu0
    %v487 = vadd.f32 0.0, %v486
    %488 = vdwg.mxu0
    %v489 = vadd.f32 %v414, %v485
    %v490 = vand.u32 2147483647, %v489
    %v491 = vsub.f32 0.0, %v490
    %v492 = vmul.f32 %v491, 1.442695
    %v493 = vpow.pop %v492
    %v494 = vadd.f32 %v493, 1.0
    %v495 = vrcp.pop %v494
    %v496 = vmul.f32 1.0, %v495
    %vm497 = vcmp.ge.f32.partialorder %v489, 0.0
    %v498 = vmul.f32 %v493, %v496
    %v499 = vsel %vm497, %v496, %v498
    %v500 = vadd.f32 %v487, %v178
    %v501 = vmul.f32 %v499, %v500
    %v502 = vadd.f32 %v415, %v501
    %v503 = vtanh.pop %v502
    %v504 = vsub.f32 1.0, %v417
    %506 = vset.pattern.permute.xlu0 0
    %507 = vperm.xlu0 %506, %v504
    %v508 = vpop.permute.xlu0 %507
    %v510 = vmul.f32 %v508, %v410
    %512 = vset.pattern.permute.xlu0 0
    %513 = vperm.xlu0 %512, %v417
    %v514 = vpop.permute.xlu0 %513
    %v516 = vmul.f32 %v514, %v503
    %v517 = vadd.f32 %v510, %v516
    %s518 = scalar_lea.vmem [#allocation8], 24
    %519 = vst [vmem:[%s518] sm:$0xff] %v517
    %s520 = scalar_lea.vmem [#allocation3], 64
    %v521 = vld [vmem:[%s520] sm:$0xff]
    %v522 = vld [vmem:[%s520 + $0x8] sm:$0xff]
    %s523 = scalar_lea.vmem %s1, 32
    %v524 = vld [vmem:[%s523] sm:$0xff]
    %525 = vmatprep.subr.mxu0 %v87
    %526 = vmatpush1.msra.mxu0 %v86
    %527 = vmatprep.subr.mxu0 %v85
    %528 = vmatpush1.msra.mxu0 %v84
    %529 = vmatprep.subr.mxu0 %v83
    %530 = vmatpush1.msra.mxu0 %v82
    %531 = vmatprep.subr.mxu0 %v81
    %532 = vmatpush1.msra.mxu0 %v80
    %533 = vmatprep.subr.mxu0 %v79
    %534 = vmatpush1.msra.mxu0 %v78
    %535 = vmatprep.subr.mxu0 %v77
    %536 = vmatpush1.msra.mxu0 %v76
    %537 = vmatprep.subr.mxu0 %v75
    %538 = vmatpush1.msra.mxu0 %v74
    %539 = vmatprep.subr.mxu0 %v73
    %540 = vmatpush1.msra.mxu0 %v72
    %541 = vmatprep.subr.mxu0 %v71
    %542 = vmatpush1.msra.mxu0 %v70
    %543 = vmatprep.subr.mxu0 %v69
    %544 = vmatpush1.msra.mxu0 %v68
    %545 = vmatprep.subr.mxu0 %v67
    %546 = vmatpush1.msra.mxu0 %v66
    %547 = vmatprep.subr.mxu0 %v65
    %548 = vmatpush1.msra.mxu0 %v64
    %549 = vmatprep.subr.mxu0 %v63
    %550 = vmatpush1.msra.mxu0 %v62
    %551 = vmatprep.subr.mxu0 %v61
    %552 = vmatpush1.msra.mxu0 %v60
    %553 = vmatprep.subr.mxu0 %v59
    %554 = vmatpush1.msra.mxu0 %v58
    %555 = vmatprep.subr.mxu0 %v57
    %556 = vmatpush1.msra.mxu0 %v56
    %557 = vmatprep.subr.mxu0 0.0
    %558 = vmatpush2.msra.mxu0 0.0
    %559 = vmatprep.subr.mxu0 0.0
    %560 = vmatpush2.msra.mxu0 0.0
    %561 = vmatprep.subr.mxu0 0.0
    %562 = vmatpush2.msra.mxu0 0.0
    %563 = vmatprep.subr.mxu0 0.0
    %564 = vmatpush2.msra.mxu0 0.0
    %565 = vmatprep.subr.mxu0 0.0
    %566 = vmatpush2.msra.mxu0 0.0
    %567 = vmatprep.subr.mxu0 0.0
    %568 = vmatpush2.msra.mxu0 0.0
    %569 = vmatprep.subr.mxu0 0.0
    %570 = vmatpush2.msra.mxu0 0.0
    %571 = vmatprep.subr.mxu0 0.0
    %572 = vmatpush2.msra.mxu0 0.0
    %573 = vmatprep.subr.mxu0 0.0
    %574 = vmatpush2.msra.mxu0 0.0
    %575 = vmatprep.subr.mxu0 0.0
    %576 = vmatpush2.msra.mxu0 0.0
    %577 = vmatprep.subr.mxu0 0.0
    %578 = vmatpush2.msra.mxu0 0.0
    %579 = vmatprep.subr.mxu0 0.0
    %580 = vmatpush2.msra.mxu0 0.0
    %581 = vmatprep.subr.mxu0 0.0
    %582 = vmatpush2.msra.mxu0 0.0
    %583 = vmatprep.subr.mxu0 0.0
    %584 = vmatpush2.msra.mxu0 0.0
    %585 = vmatprep.subr.mxu0 0.0
    %586 = vmatpush2.msra.mxu0 0.0
    %587 = vmatprep.subr.mxu0 0.0
    %588 = vmatpush2.msra.mxu0 0.0
    %589 = vmatprep.mubr.f32.mxu0 0.0
    %590 = vmatmul.mubr.f32.gmra.mxu0 %v517
    %v591 = vpop.f32.mrf.mxu0
    %v592 = vadd.f32 0.0, %v591
    %v593 = vpop.f32.mrf.mxu0
    %v594 = vadd.f32 0.0, %v593
    %595 = vdwg.mxu0
    %v596 = vadd.f32 %v521, %v592
    %v597 = vand.u32 2147483647, %v596
    %v598 = vsub.f32 0.0, %v597
    %v599 = vmul.f32 %v598, 1.442695
    %v600 = vpow.pop %v599
    %v601 = vadd.f32 %v600, 1.0
    %v602 = vrcp.pop %v601
    %v603 = vmul.f32 1.0, %v602
    %vm604 = vcmp.ge.f32.partialorder %v596, 0.0
    %v605 = vmul.f32 %v600, %v603
    %v606 = vsel %vm604, %v603, %v605
    %v607 = vadd.f32 %v594, %v178
    %v608 = vmul.f32 %v606, %v607
    %v609 = vadd.f32 %v522, %v608
    %v610 = vtanh.pop %v609
    %v611 = vsub.f32 1.0, %v524
    %613 = vset.pattern.permute.xlu0 0
    %614 = vperm.xlu0 %613, %v611
    %v615 = vpop.permute.xlu0 %614
    %v617 = vmul.f32 %v615, %v517
    %619 = vset.pattern.permute.xlu0 0
    %620 = vperm.xlu0 %619, %v524
    %v621 = vpop.permute.xlu0 %620
    %v623 = vmul.f32 %v621, %v610
    %v624 = vadd.f32 %v617, %v623
    %s625 = scalar_lea.vmem [#allocation8], 32
    %626 = vst [vmem:[%s625] sm:$0xff] %v624
    %627 = vst [vmem:[#allocation2] sm:$0xff] %v624
    // Predicated region
    $region34: #{tpu_custom_call.1} parent=1 // pred_check
      _
    $region35: #{tpu_custom_call.1} parent=1 // pred_check_branch
      %629 = sbr.rel (0) target = $region37
    $region36: #{tpu_custom_call.1} parent=1 // pred_region
      %s631 = ssub.s32 640, 640
      %632 = vsyncadd [#allocation5], %s631
      %s633 = sshll.u32 [#allocation8], 4
      %s634 = int_to_ptr.vmem [resolvable:$true] %s633
      %639 = dma.vmem_to_hbm [thread:$0]  %s634, 640, %s5, [#allocation5], 128, 128, 8
    $region37: #{tpu_custom_call.1} parent=1 // pred_fallthru
      _
    // Predicated region
    $region38: #{tpu_custom_call.1} parent=1 // pred_check
      _
    $region39: #{tpu_custom_call.1} parent=1 // pred_check_branch
      %641 = sbr.rel (0) target = $region41
    $region40: #{tpu_custom_call.1} parent=1 // pred_region
      %642 = dma.done [#allocation5], 640
    $region41: #{tpu_custom_call.1} parent=1 // pred_fallthru
      _
    %643 = vsyncpa [#allocation4], 1
    %644 = vsyncpa [#allocation7], 1
    %645 = vsyncpa [#allocation5], 1

</llo_original>
